<compile_context>
chip_gen: v6e
topology: v6e:2x2x1
jax: 0.10.0
libtpu: 0.0.40
codegen_flags: <defaults>
</compile_context>

<pallas_src>
import functools

import jax
import jax.numpy as jnp
from jax import lax
from jax.experimental import pallas as pl
from jax.experimental.pallas import tpu as pltpu


# ----------------------------------------------------------------------------
# Helpers
# ----------------------------------------------------------------------------
def _pick_block_batch(batch, seq, target_rows=256):
    """Batch elements per grid step: fill the MXU M-dim (~256 rows) but keep
    >= 2 grid steps when B >= 2 (v7x has 2 TensorCores), Bt | B, and keep the
    second-minor block dim a multiple of 8 (or the full extent)."""
    cap = max(1, batch // 2)
    want = max(1, -(-target_rows // seq))          # ceil(target_rows / seq)
    bt = min(cap, want)
    while bt > 1 and batch % bt != 0:
        bt -= 1

    def _ok(b):
        return (b * seq) % 8 == 0 or b == batch

    if not _ok(bt):
        cand = [b for b in range(bt, 0, -1) if batch % b == 0 and _ok(b)]
        bt = cand[0] if cand else batch
    return bt


def _vmem_limit_bytes():
    """~75% of physical VMEM, capped at 100 MiB: ~48 MiB on v7x (64 MiB),
    ~96 MiB on v5e/v6e (128 MiB).  Conservative fallback if the query fails."""
    try:
        info = pltpu.get_tpu_info()
        cap = getattr(info, "vmem_capacity_bytes", None)
        if cap:
            return int(min(100 * 1024 * 1024, (cap * 3) // 4))
    except Exception:
        pass
    return 48 * 1024 * 1024


# ----------------------------------------------------------------------------
# Fused Pallas kernel: Bt batch elements (Bt*N rows) per grid step
# ----------------------------------------------------------------------------
def _fused_attention_kernel(x_ref, wqkv_ref, wgate_ref, wout_ref, o_ref,
                            qkv_scr, gate_scr, gated_scr, *,
                            heads, dim_head, block_b, seq):
    H, Dh = heads, dim_head
    di = H * Dh

    # ---- fused projections over all Bt*N rows of this block (bf16 MXU
    #      operands, f32 accumulation).  Weights arrive bf16: no in-kernel cast.
    x2 = x_ref[...].astype(jnp.bfloat16)                              # (R, D)
    qkv_scr[...] = jnp.dot(x2, wqkv_ref[...],
                           preferred_element_type=jnp.float32
                           ).astype(jnp.bfloat16)                     # (R, 3*H*Dh)
    gl = jnp.dot(x2, wgate_ref[...],
                 preferred_element_type=jnp.float32)                  # (R, H*Dh)
    gate_scr[...] = gl * jax.nn.sigmoid(gl)                           # SiLU, f32, once

    # ---- per-batch-element attention: fori_loop bounds live ranges to one
    #      batch element's tiles at a time.
    def per_batch(bb, carry):
        row0 = bb * seq
        if seq % 8 == 0:
            row0 = pl.multiple_of(row0, 8)        # aligned sublane slices
        rows = pl.ds(row0, seq)
        # Heads: small static loop (H=4).  Per-head lane offsets are 32-wide
        # sub-tile slices; a traced head index would require dynamic minor-dim
        # offsets Mosaic can't slice cheaply.  Each head's result is stored to
        # gated_scr immediately so its (N,N) tiles die right away.
        for h in range(H):
            c0 = h * Dh
            q = qkv_scr[rows, c0:c0 + Dh]                  # bf16, scale pre-folded
            k = qkv_scr[rows, di + c0:di + c0 + Dh]
            v = qkv_scr[rows, 2 * di + c0:2 * di + c0 + Dh]

            # q @ k^T without materialising k.T
            s = lax.dot_general(q, k, (((1,), (1,)), ((), ())),
                                preferred_element_type=jnp.float32)   # (N, N)
            m = jnp.max(s, axis=-1, keepdims=True)
            p = jnp.exp(s - m)
            denom = jnp.sum(p, axis=-1, keepdims=True)
            attn = jnp.dot(p.astype(jnp.bfloat16), v,
                           preferred_element_type=jnp.float32)        # (N, Dh)
            attn = attn * pl.reciprocal(denom, approx=True)           # EUP slot

            g = gate_scr[rows, c0:c0 + Dh]                            # SiLU(gate), f32
            gated_scr[rows, c0:c0 + Dh] = (attn * g).astype(jnp.bfloat16)
        return carry

    lax.fori_loop(0, block_b, per_batch, 0)

    # ---- output projection: one lane-dense (R, H*Dh) @ (H*Dh, D) matmul
    #      (K = H*Dh = 128 deep) instead of H separate K=32 matmuls + concat.
    o_ref[...] = jnp.dot(gated_scr[...], wout_ref[...],
                         preferred_element_type=jnp.float32).astype(o_ref.dtype)


# ----------------------------------------------------------------------------
# Module wrapper
# ----------------------------------------------------------------------------
class AttentionPallas:
    def __init__(self, dim, dim_head=32, heads=4, dropout=0.0, key=None):
        # dropout=0.0 -> identity at inference; not applied (documented).
        self.dim = dim
        self.dim_head = dim_head
        self.heads = heads
        self.scale = dim_head ** (-0.5)
        dim_inner = dim_head * heads
        self.dim_inner = dim_inner

        if key is None:
            key = jax.random.PRNGKey(0)
        k1, k2, k3 = jax.random.split(key, 3)

        def init_linear(k, fan_in, fan_out):
            bound = 1.0 / (fan_in ** 0.5)
            return jax.random.uniform(
                k, (fan_in, fan_out), jnp.float32, minval=-bound, maxval=bound
            )

        # f32 masters (kept for the pure-JAX reference)
        self.w_qkv = init_linear(k1, dim, dim_inner * 3)   # to_qkv Linear
        self.w_gate = init_linear(k2, dim, dim_inner)      # to_v_gates Linear
        self.w_out = init_linear(k3, dim_inner, dim)       # to_out Linear

        # Kernel weights: fold softmax scale into the q columns (host-side,
        # zero runtime cost) and cast once to bf16 (halves DMA + resident VMEM).
        w_qkv_scaled = self.w_qkv.at[:, :dim_inner].multiply(self.scale)
        self.w_qkv_bf16 = w_qkv_scaled.astype(jnp.bfloat16)
        self.w_gate_bf16 = self.w_gate.astype(jnp.bfloat16)
        self.w_out_bf16 = self.w_out.astype(jnp.bfloat16)

    def __call__(self, x):
        B, N, D = x.shape
        H, Dh = self.heads, self.dim_head
        di = H * Dh

        Bt = _pick_block_batch(B, N)          # batch elements per grid step
        R = Bt * N                            # rows per grid step
        grid = (B // Bt,)

        # Present x as lane/sublane-dense 2-D (B*N, D); reshape of leading
        # dims is free on the host.
        x2d = x.reshape(B * N, D)

        # advisory cost estimate so XLA schedules around the custom call
        flops = B * (2 * N * D * 3 * di        # qkv projection
                     + 2 * N * D * di          # gate projection
                     + 4 * H * N * N * Dh      # q k^T and p v
                     + 2 * N * di * D)         # output projection
        transcendentals = B * (H * N * N + N * di)          # exp + sigmoid
        bytes_accessed = (4 * 2 * B * N * D                 # x + out, f32
                          + 2 * (D * 3 * di + D * di + di * D))  # bf16 weights

        kernel = functools.partial(
            _fused_attention_kernel,
            heads=H, dim_head=Dh, block_b=Bt, seq=N)

        out2d = pl.pallas_call(
            kernel,
            out_shape=jax.ShapeDtypeStruct((B * N, D), x.dtype),
            grid=grid,
            in_specs=[
                pl.BlockSpec((R, D), lambda i: (i, 0)),        # x rows (per step)
                # Weight index_maps are constant -> fetched once, not re-DMA'd
                # across grid steps; bf16 halves their resident footprint.
                pl.BlockSpec((D, 3 * di), lambda i: (0, 0)),   # Wqkv (resident)
                pl.BlockSpec((D, di), lambda i: (0, 0)),       # Wgate (resident)
                pl.BlockSpec((di, D), lambda i: (0, 0)),       # Wout (resident)
            ],
            out_specs=pl.BlockSpec((R, D), lambda i: (i, 0)),
            scratch_shapes=[
                pltpu.VMEM((R, 3 * di), jnp.bfloat16),   # qkv  (this block)
                pltpu.VMEM((R, di), jnp.float32),        # SiLU(gate)
                pltpu.VMEM((R, di), jnp.bfloat16),       # gated attention out
            ],
            compiler_params=pltpu.CompilerParams(
                dimension_semantics=("parallel",),       # shard row-blocks across TCs
                vmem_limit_bytes=_vmem_limit_bytes(),    # per-generation budget
            ),
            cost_estimate=pl.CostEstimate(
                flops=flops,
                transcendentals=transcendentals,
                bytes_accessed=bytes_accessed),
        )(x2d, self.w_qkv_bf16, self.w_gate_bf16, self.w_out_bf16)

        return out2d.reshape(B, N, D)


# ----------------------------------------------------------------------------
# Pure-JAX f32 reference (for correctness check)
# ----------------------------------------------------------------------------
def _reference(attn: AttentionPallas, x):
    B, N, D = x.shape
    H, Dh = attn.heads, attn.dim_head
    qkv = (x.reshape(B * N, D) @ attn.w_qkv).reshape(B, N, 3, H, Dh)
    qkv = qkv.transpose(2, 0, 3, 1, 4)
    q, k, v = qkv[0], qkv[1], qkv[2]
    s = jnp.einsum("bhnd,bhmd->bhnm", q, k) * attn.scale
    p = jax.nn.softmax(s, axis=-1)
    o = jnp.einsum("bhnm,bhmd->bhnd", p, v)
    g = jax.nn.silu(x.reshape(B * N, D) @ attn.w_gate).reshape(B, N, H, Dh)
    g = g.transpose(0, 2, 1, 3)
    o = o * g
    o = o.transpose(0, 2, 1, 3).reshape(B * N, H * Dh) @ attn.w_out
    return o.reshape(B, N, D)


if __name__ == "__main__":
    key = jax.random.PRNGKey(0)
    k_param, k_x = jax.random.split(key)

    B, N, dim = 2, 8, 32
    attn = AttentionPallas(dim=dim, dim_head=32, heads=4, dropout=0.0, key=k_param)

    x = jax.random.normal(k_x, (B, N, dim), jnp.float32)

    out = attn(x)
    out = jax.block_until_ready(out)

    ref = _reference(attn, x)
    assert out.shape == (B, N, dim)
    # bf16 weights / MXU operands + approximate reciprocal -> loosened tolerance
    assert jnp.allclose(out, ref, atol=3e-2, rtol=3e-2), "mismatch vs reference"

    print("KERNEL_OK")
</pallas_src>

<mosaic_0001>
module attributes {stable_mosaic.version = 11 : i64} {
  func.func @_fused_attention_kernel(%arg0: i32, %arg1: memref<8x32xf32, #tpu.memory_space<vmem>>, %arg2: memref<32x384xbf16, #tpu.memory_space<vmem>>, %arg3: memref<32x128xbf16, #tpu.memory_space<vmem>>, %arg4: memref<128x32xbf16, #tpu.memory_space<vmem>>, %arg5: memref<8x32xf32, #tpu.memory_space<vmem>>, %arg6: memref<8x384xbf16, #tpu.memory_space<vmem>>, %arg7: memref<8x128xf32, #tpu.memory_space<vmem>>, %arg8: memref<8x128xbf16, #tpu.memory_space<vmem>>) attributes {dimension_semantics = [#tpu.dimension_semantics<parallel>], iteration_bounds = array<i64: 2>, scalar_prefetch = 0 : i64, scratch_operands = 3 : i64, tpu.core_type = #tpu.core_type<tc>, window_params = [{transform_indices = @transform_0, window_bounds = array<i64: 8, 32>}, {pipeline_mode = #tpu.pipeline_mode<synchronous>, transform_indices = @transform_1, window_bounds = array<i64: 32, 384>}, {pipeline_mode = #tpu.pipeline_mode<synchronous>, transform_indices = @transform_2, window_bounds = array<i64: 32, 128>}, {pipeline_mode = #tpu.pipeline_mode<synchronous>, transform_indices = @transform_3, window_bounds = array<i64: 128, 32>}, {transform_indices = @transform_4, window_bounds = array<i64: 8, 32>}]} {
    %c0 = arith.constant 0 : index
    %c0_0 = arith.constant 0 : index
    %0 = vector.load %arg1[%c0, %c0_0] : memref<8x32xf32, #tpu.memory_space<vmem>>, vector<8x32xf32>
    %1 = arith.truncf %0 : vector<8x32xf32> to vector<8x32xbf16>
    %c0_1 = arith.constant 0 : index
    %c0_2 = arith.constant 0 : index
    %2 = vector.load %arg2[%c0_1, %c0_2] : memref<32x384xbf16, #tpu.memory_space<vmem>>, vector<32x384xbf16>
    %cst = arith.constant dense<0.000000e+00> : vector<8x384xf32>
    %3 = tpu.matmul %1, %2, %cst {dimension_numbers = #tpu.dot_dimension_numbers<[1], [0], [0], [1], [0, 0, 1, 1], [], []>} : vector<8x32xbf16>, vector<32x384xbf16>, vector<8x384xf32> -> vector<8x384xf32>
    %4 = arith.truncf %3 : vector<8x384xf32> to vector<8x384xbf16>
    %c0_3 = arith.constant 0 : index
    %c0_4 = arith.constant 0 : index
    %5 = vector.load %arg6[%c0_3, %c0_4] : memref<8x384xbf16, #tpu.memory_space<vmem>>, vector<8x384xbf16>
    tpu.vector_store %arg6[%c0_3, %c0_4], %4 {strides = array<i32>} : memref<8x384xbf16, #tpu.memory_space<vmem>>, vector<8x384xbf16>,
    %c0_5 = arith.constant 0 : index
    %c0_6 = arith.constant 0 : index
    %6 = vector.load %arg3[%c0_5, %c0_6] : memref<32x128xbf16, #tpu.memory_space<vmem>>, vector<32x128xbf16>
    %cst_7 = arith.constant dense<0.000000e+00> : vector<8x128xf32>
    %7 = tpu.matmul %1, %6, %cst_7 {dimension_numbers = #tpu.dot_dimension_numbers<[1], [0], [0], [1], [0, 0, 1, 1], [], []>} : vector<8x32xbf16>, vector<32x128xbf16>, vector<8x128xf32> -> vector<8x128xf32>
    %8 = arith.negf %7 : vector<8x128xf32>
    %9 = math.exp %8 : vector<8x128xf32>
    %cst_8 = arith.constant 1.000000e+00 : f32
    %10 = vector.broadcast %cst_8 : f32 to vector<8x128xf32>
    %11 = arith.addf %10, %9 : vector<8x128xf32>
    %12 = arith.divf %10, %11 : vector<8x128xf32>
    %13 = arith.mulf %7, %12 : vector<8x128xf32>
    %c0_9 = arith.constant 0 : index
    %c0_10 = arith.constant 0 : index
    %14 = vector.load %arg7[%c0_9, %c0_10] : memref<8x128xf32, #tpu.memory_space<vmem>>, vector<8x128xf32>
    tpu.vector_store %arg7[%c0_9, %c0_10], %13 {strides = array<i32>} : memref<8x128xf32, #tpu.memory_space<vmem>>, vector<8x128xf32>,
    %c0_i32 = arith.constant 0 : i32
    %c8_i32 = arith.constant 8 : i32
    %15 = arith.muli %c0_i32, %c8_i32 : i32
    %16 = tpu.assume_multiple %15, 8 : i32
    %17 = arith.index_cast %16 : i32 to index
    %c0_11 = arith.constant 0 : index
    %18 = vector.load %arg6[%17, %c0_11] : memref<8x384xbf16, #tpu.memory_space<vmem>>, vector<8x32xbf16>
    %19 = arith.index_cast %16 : i32 to index
    %c128 = arith.constant 128 : index
    %20 = vector.load %arg6[%19, %c128] : memref<8x384xbf16, #tpu.memory_space<vmem>>, vector<8x32xbf16>
    %21 = arith.index_cast %16 : i32 to index
    %c256 = arith.constant 256 : index
    %22 = vector.load %arg6[%21, %c256] : memref<8x384xbf16, #tpu.memory_space<vmem>>, vector<8x32xbf16>
    %cst_12 = arith.constant dense<0.000000e+00> : vector<8x8xf32>
    %23 = tpu.matmul %18, %20, %cst_12 {dimension_numbers = #tpu.dot_dimension_numbers<[1], [1], [0], [0], [0, 0, 1, 0], [], []>} : vector<8x32xbf16>, vector<8x32xbf16>, vector<8x8xf32> -> vector<8x8xf32>
    %cst_13 = arith.constant dense<0xFF800000> : vector<8xf32>
    %24 = vector.multi_reduction <maximumf>, %23, %cst_13 [1] : vector<8x8xf32> to vector<8xf32>
    %25 = vector.shape_cast %24 : vector<8xf32> to vector<8x1xf32>
    %26 = vector.broadcast %25 : vector<8x1xf32> to vector<8x8xf32>
    %27 = arith.subf %23, %26 : vector<8x8xf32>
    %28 = math.exp %27 : vector<8x8xf32>
    %cst_14 = arith.constant dense<0.000000e+00> : vector<8xf32>
    %29 = vector.multi_reduction <add>, %28, %cst_14 [1] : vector<8x8xf32> to vector<8xf32>
    %30 = vector.shape_cast %29 : vector<8xf32> to vector<8x1xf32>
    %31 = arith.truncf %28 : vector<8x8xf32> to vector<8x8xbf16>
    %cst_15 = arith.constant dense<0.000000e+00> : vector<8x32xf32>
    %32 = tpu.matmul %31, %22, %cst_15 {dimension_numbers = #tpu.dot_dimension_numbers<[1], [0], [0], [1], [0, 0, 1, 1], [], []>} : vector<8x8xbf16>, vector<8x32xbf16>, vector<8x32xf32> -> vector<8x32xf32>
    %33 = tpu.reciprocal %30 {approx = true} : vector<8x1xf32> -> vector<8x1xf32>
    %34 = vector.broadcast %33 : vector<8x1xf32> to vector<8x32xf32>
    %35 = arith.mulf %32, %34 : vector<8x32xf32>
    %36 = arith.index_cast %16 : i32 to index
    %c0_16 = arith.constant 0 : index
    %37 = vector.load %arg7[%36, %c0_16] : memref<8x128xf32, #tpu.memory_space<vmem>>, vector<8x32xf32>
    %38 = arith.mulf %35, %37 : vector<8x32xf32>
    %39 = arith.truncf %38 : vector<8x32xf32> to vector<8x32xbf16>
    %40 = arith.index_cast %16 : i32 to index
    %c0_17 = arith.constant 0 : index
    %41 = vector.load %arg8[%40, %c0_17] : memref<8x128xbf16, #tpu.memory_space<vmem>>, vector<8x32xbf16>
    tpu.vector_store %arg8[%40, %c0_17], %39 {strides = array<i32>} : memref<8x128xbf16, #tpu.memory_space<vmem>>, vector<8x32xbf16>,
    %42 = arith.index_cast %16 : i32 to index
    %c32 = arith.constant 32 : index
    %43 = vector.load %arg6[%42, %c32] : memref<8x384xbf16, #tpu.memory_space<vmem>>, vector<8x32xbf16>
    %44 = arith.index_cast %16 : i32 to index
    %c160 = arith.constant 160 : index
    %45 = vector.load %arg6[%44, %c160] : memref<8x384xbf16, #tpu.memory_space<vmem>>, vector<8x32xbf16>
    %46 = arith.index_cast %16 : i32 to index
    %c288 = arith.constant 288 : index
    %47 = vector.load %arg6[%46, %c288] : memref<8x384xbf16, #tpu.memory_space<vmem>>, vector<8x32xbf16>
    %cst_18 = arith.constant dense<0.000000e+00> : vector<8x8xf32>
    %48 = tpu.matmul %43, %45, %cst_18 {dimension_numbers = #tpu.dot_dimension_numbers<[1], [1], [0], [0], [0, 0, 1, 0], [], []>} : vector<8x32xbf16>, vector<8x32xbf16>, vector<8x8xf32> -> vector<8x8xf32>
    %cst_19 = arith.constant dense<0xFF800000> : vector<8xf32>
    %49 = vector.multi_reduction <maximumf>, %48, %cst_19 [1] : vector<8x8xf32> to vector<8xf32>
    %50 = vector.shape_cast %49 : vector<8xf32> to vector<8x1xf32>
    %51 = vector.broadcast %50 : vector<8x1xf32> to vector<8x8xf32>
    %52 = arith.subf %48, %51 : vector<8x8xf32>
    %53 = math.exp %52 : vector<8x8xf32>
    %cst_20 = arith.constant dense<0.000000e+00> : vector<8xf32>
    %54 = vector.multi_reduction <add>, %53, %cst_20 [1] : vector<8x8xf32> to vector<8xf32>
    %55 = vector.shape_cast %54 : vector<8xf32> to vector<8x1xf32>
    %56 = arith.truncf %53 : vector<8x8xf32> to vector<8x8xbf16>
    %cst_21 = arith.constant dense<0.000000e+00> : vector<8x32xf32>
    %57 = tpu.matmul %56, %47, %cst_21 {dimension_numbers = #tpu.dot_dimension_numbers<[1], [0], [0], [1], [0, 0, 1, 1], [], []>} : vector<8x8xbf16>, vector<8x32xbf16>, vector<8x32xf32> -> vector<8x32xf32>
    %58 = tpu.reciprocal %55 {approx = true} : vector<8x1xf32> -> vector<8x1xf32>
    %59 = vector.broadcast %58 : vector<8x1xf32> to vector<8x32xf32>
    %60 = arith.mulf %57, %59 : vector<8x32xf32>
    %61 = arith.index_cast %16 : i32 to index
    %c32_22 = arith.constant 32 : index
    %62 = vector.load %arg7[%61, %c32_22] : memref<8x128xf32, #tpu.memory_space<vmem>>, vector<8x32xf32>
    %63 = arith.mulf %60, %62 : vector<8x32xf32>
    %64 = arith.truncf %63 : vector<8x32xf32> to vector<8x32xbf16>
    %65 = arith.index_cast %16 : i32 to index
    %c32_23 = arith.constant 32 : index
    %66 = vector.load %arg8[%65, %c32_23] : memref<8x128xbf16, #tpu.memory_space<vmem>>, vector<8x32xbf16>
    tpu.vector_store %arg8[%65, %c32_23], %64 {strides = array<i32>} : memref<8x128xbf16, #tpu.memory_space<vmem>>, vector<8x32xbf16>,
    %67 = arith.index_cast %16 : i32 to index
    %c64 = arith.constant 64 : index
    %68 = vector.load %arg6[%67, %c64] : memref<8x384xbf16, #tpu.memory_space<vmem>>, vector<8x32xbf16>
    %69 = arith.index_cast %16 : i32 to index
    %c192 = arith.constant 192 : index
    %70 = vector.load %arg6[%69, %c192] : memref<8x384xbf16, #tpu.memory_space<vmem>>, vector<8x32xbf16>
    %71 = arith.index_cast %16 : i32 to index
    %c320 = arith.constant 320 : index
    %72 = vector.load %arg6[%71, %c320] : memref<8x384xbf16, #tpu.memory_space<vmem>>, vector<8x32xbf16>
    %cst_24 = arith.constant dense<0.000000e+00> : vector<8x8xf32>
    %73 = tpu.matmul %68, %70, %cst_24 {dimension_numbers = #tpu.dot_dimension_numbers<[1], [1], [0], [0], [0, 0, 1, 0], [], []>} : vector<8x32xbf16>, vector<8x32xbf16>, vector<8x8xf32> -> vector<8x8xf32>
    %cst_25 = arith.constant dense<0xFF800000> : vector<8xf32>
    %74 = vector.multi_reduction <maximumf>, %73, %cst_25 [1] : vector<8x8xf32> to vector<8xf32>
    %75 = vector.shape_cast %74 : vector<8xf32> to vector<8x1xf32>
    %76 = vector.broadcast %75 : vector<8x1xf32> to vector<8x8xf32>
    %77 = arith.subf %73, %76 : vector<8x8xf32>
    %78 = math.exp %77 : vector<8x8xf32>
    %cst_26 = arith.constant dense<0.000000e+00> : vector<8xf32>
    %79 = vector.multi_reduction <add>, %78, %cst_26 [1] : vector<8x8xf32> to vector<8xf32>
    %80 = vector.shape_cast %79 : vector<8xf32> to vector<8x1xf32>
    %81 = arith.truncf %78 : vector<8x8xf32> to vector<8x8xbf16>
    %cst_27 = arith.constant dense<0.000000e+00> : vector<8x32xf32>
    %82 = tpu.matmul %81, %72, %cst_27 {dimension_numbers = #tpu.dot_dimension_numbers<[1], [0], [0], [1], [0, 0, 1, 1], [], []>} : vector<8x8xbf16>, vector<8x32xbf16>, vector<8x32xf32> -> vector<8x32xf32>
    %83 = tpu.reciprocal %80 {approx = true} : vector<8x1xf32> -> vector<8x1xf32>
    %84 = vector.broadcast %83 : vector<8x1xf32> to vector<8x32xf32>
    %85 = arith.mulf %82, %84 : vector<8x32xf32>
    %86 = arith.index_cast %16 : i32 to index
    %c64_28 = arith.constant 64 : index
    %87 = vector.load %arg7[%86, %c64_28] : memref<8x128xf32, #tpu.memory_space<vmem>>, vector<8x32xf32>
    %88 = arith.mulf %85, %87 : vector<8x32xf32>
    %89 = arith.truncf %88 : vector<8x32xf32> to vector<8x32xbf16>
    %90 = arith.index_cast %16 : i32 to index
    %c64_29 = arith.constant 64 : index
    %91 = vector.load %arg8[%90, %c64_29] : memref<8x128xbf16, #tpu.memory_space<vmem>>, vector<8x32xbf16>
    tpu.vector_store %arg8[%90, %c64_29], %89 {strides = array<i32>} : memref<8x128xbf16, #tpu.memory_space<vmem>>, vector<8x32xbf16>,
    %92 = arith.index_cast %16 : i32 to index
    %c96 = arith.constant 96 : index
    %93 = vector.load %arg6[%92, %c96] : memref<8x384xbf16, #tpu.memory_space<vmem>>, vector<8x32xbf16>
    %94 = arith.index_cast %16 : i32 to index
    %c224 = arith.constant 224 : index
    %95 = vector.load %arg6[%94, %c224] : memref<8x384xbf16, #tpu.memory_space<vmem>>, vector<8x32xbf16>
    %96 = arith.index_cast %16 : i32 to index
    %c352 = arith.constant 352 : index
    %97 = vector.load %arg6[%96, %c352] : memref<8x384xbf16, #tpu.memory_space<vmem>>, vector<8x32xbf16>
    %cst_30 = arith.constant dense<0.000000e+00> : vector<8x8xf32>
    %98 = tpu.matmul %93, %95, %cst_30 {dimension_numbers = #tpu.dot_dimension_numbers<[1], [1], [0], [0], [0, 0, 1, 0], [], []>} : vector<8x32xbf16>, vector<8x32xbf16>, vector<8x8xf32> -> vector<8x8xf32>
    %cst_31 = arith.constant dense<0xFF800000> : vector<8xf32>
    %99 = vector.multi_reduction <maximumf>, %98, %cst_31 [1] : vector<8x8xf32> to vector<8xf32>
    %100 = vector.shape_cast %99 : vector<8xf32> to vector<8x1xf32>
    %101 = vector.broadcast %100 : vector<8x1xf32> to vector<8x8xf32>
    %102 = arith.subf %98, %101 : vector<8x8xf32>
    %103 = math.exp %102 : vector<8x8xf32>
    %cst_32 = arith.constant dense<0.000000e+00> : vector<8xf32>
    %104 = vector.multi_reduction <add>, %103, %cst_32 [1] : vector<8x8xf32> to vector<8xf32>
    %105 = vector.shape_cast %104 : vector<8xf32> to vector<8x1xf32>
    %106 = arith.truncf %103 : vector<8x8xf32> to vector<8x8xbf16>
    %cst_33 = arith.constant dense<0.000000e+00> : vector<8x32xf32>
    %107 = tpu.matmul %106, %97, %cst_33 {dimension_numbers = #tpu.dot_dimension_numbers<[1], [0], [0], [1], [0, 0, 1, 1], [], []>} : vector<8x8xbf16>, vector<8x32xbf16>, vector<8x32xf32> -> vector<8x32xf32>
    %108 = tpu.reciprocal %105 {approx = true} : vector<8x1xf32> -> vector<8x1xf32>
    %109 = vector.broadcast %108 : vector<8x1xf32> to vector<8x32xf32>
    %110 = arith.mulf %107, %109 : vector<8x32xf32>
    %111 = arith.index_cast %16 : i32 to index
    %c96_34 = arith.constant 96 : index
    %112 = vector.load %arg7[%111, %c96_34] : memref<8x128xf32, #tpu.memory_space<vmem>>, vector<8x32xf32>
    %113 = arith.mulf %110, %112 : vector<8x32xf32>
    %114 = arith.truncf %113 : vector<8x32xf32> to vector<8x32xbf16>
    %115 = arith.index_cast %16 : i32 to index
    %c96_35 = arith.constant 96 : index
    %116 = vector.load %arg8[%115, %c96_35] : memref<8x128xbf16, #tpu.memory_space<vmem>>, vector<8x32xbf16>
    tpu.vector_store %arg8[%115, %c96_35], %114 {strides = array<i32>} : memref<8x128xbf16, #tpu.memory_space<vmem>>, vector<8x32xbf16>,
    %c1_i32 = arith.constant 1 : i32
    %c0_36 = arith.constant 0 : index
    %c0_37 = arith.constant 0 : index
    %117 = vector.load %arg8[%c0_36, %c0_37] : memref<8x128xbf16, #tpu.memory_space<vmem>>, vector<8x128xbf16>
    %c0_38 = arith.constant 0 : index
    %c0_39 = arith.constant 0 : index
    %118 = vector.load %arg4[%c0_38, %c0_39] : memref<128x32xbf16, #tpu.memory_space<vmem>>, vector<128x32xbf16>
    %cst_40 = arith.constant dense<0.000000e+00> : vector<8x32xf32>
    %119 = tpu.matmul %117, %118, %cst_40 {dimension_numbers = #tpu.dot_dimension_numbers<[1], [0], [0], [1], [0, 0, 1, 1], [], []>} : vector<8x128xbf16>, vector<128x32xbf16>, vector<8x32xf32> -> vector<8x32xf32>
    %c0_41 = arith.constant 0 : index
    %c0_42 = arith.constant 0 : index
    %120 = vector.load %arg5[%c0_41, %c0_42] : memref<8x32xf32, #tpu.memory_space<vmem>>, vector<8x32xf32>
    tpu.vector_store %arg5[%c0_41, %c0_42], %119 {strides = array<i32>} : memref<8x32xf32, #tpu.memory_space<vmem>>, vector<8x32xf32>,
    return
  }
  func.func @transform_0(%arg0: i32) -> (i32, i32) {
    %c0_i32 = arith.constant 0 : i32
    %c0_i32_0 = arith.constant 0 : i32
    return %arg0, %c0_i32 : i32, i32
  }
  func.func @transform_1(%arg0: i32) -> (i32, i32) {
    %c0_i32 = arith.constant 0 : i32
    %c0_i32_0 = arith.constant 0 : i32
    %c0_i32_1 = arith.constant 0 : i32
    return %c0_i32, %c0_i32_0 : i32, i32
  }
  func.func @transform_2(%arg0: i32) -> (i32, i32) {
    %c0_i32 = arith.constant 0 : i32
    %c0_i32_0 = arith.constant 0 : i32
    %c0_i32_1 = arith.constant 0 : i32
    return %c0_i32, %c0_i32_0 : i32, i32
  }
  func.func @transform_3(%arg0: i32) -> (i32, i32) {
    %c0_i32 = arith.constant 0 : i32
    %c0_i32_0 = arith.constant 0 : i32
    %c0_i32_1 = arith.constant 0 : i32
    return %c0_i32, %c0_i32_0 : i32, i32
  }
  func.func @transform_4(%arg0: i32) -> (i32, i32) {
    %c0_i32 = arith.constant 0 : i32
    %c0_i32_0 = arith.constant 0 : i32
    return %arg0, %c0_i32 : i32, i32
  }
}

</mosaic_0001>

<llo_original>
// kernel: tpu_custom_call.1
$region0: #{tpu_custom_call.1}
  #allocation0 [shape = 'u32[]', space=smem, size = 0x4, offset = 0x4, fixed_abs, tag = 'smem constant byte address 0x4 - core index']
  #allocation1 [shape = 'u32[144,128]{1,0:T(1,128)}', space=vmem, size = 0x12000, scoped, tag = 'internal scratch']
  #allocation2 [shape = 'bf16[8,384]{1,0:T(8,128)(2,1)}', space=vmem, size = 0x1800, scoped, tag = 'scratch operand']
  #allocation3 [shape = 'f32[8,128]{1,0:T(8,128)}', space=vmem, size = 0x1000, scoped, tag = 'scratch operand']
  #allocation4 [shape = 'bf16[8,128]{1,0:T(8,128)(2,1)}', space=vmem, size = 0x800, scoped, tag = 'scratch operand']
  %s0 = inlined_call_operand.vmem [shape: f32[16,32], index: 0, kind: input, shape index: {}]
  %s1 = inlined_call_operand.vmem [shape: bf16[32,384], index: 1, kind: input, shape index: {}]
  %s2 = inlined_call_operand.vmem [shape: bf16[32,128], index: 2, kind: input, shape index: {}]
  %s3 = inlined_call_operand.vmem [shape: bf16[128,32], index: 3, kind: input, shape index: {}]
  %s4 = inlined_call_operand.hbm [shape: f32[16,32], index: 4, kind: output, shape index: {}]
  %s5 = sld [smem:[#allocation0]]
  $region49: #{tpu_custom_call.1} parent=0
    _
  %s7 = ssub.s32 1, %s5
  %s8 = scalar_select 0, %s7, %s5
  $region1: #{tpu_custom_call.1} parent=0
    #allocation5 [shape = 'u8[8192]{0}', space=vmem, size = 0x2000, scoped, tag = 'output window, operand 0']
    #allocation6 [shape = 's32[2]{0}', space=sflag, size = 0x8, scoped, tag = 'scoped memory for tpu_custom_call.1']
    %9 = vsyncpa [#allocation6], 0
    %s10 = scalar_lea.sflag [#allocation6], 1
    %11 = vsyncpa %s10, 0
    loop: start=0, step=1, limit=4
    $region2: #{tpu_custom_call.1} parent=1 // loop_pre_header
      _
    $region3: #{tpu_custom_call.1} parent=1 // loop_header
      %s13 = sphi 0, %s17
      %p14 = scmp.ge.s32.totalorder %s13, 4
      %s23 = sphi 0, %s25
      %s26 = sphi 0, %s23
      %s27 = sphi 0, %s26
      %s43 = sphi 0, %s27
      %s47 = sphi 0, %s47
      %s49 = sphi 0, %s47
      %s50 = sphi 0, %s49
      %s64 = sphi 0, %s50
      %s68 = sphi 0, %s68
      %s70 = sphi 0, %s68
      %s71 = sphi 0, %s70
      %s85 = sphi 0, %s71
      %s89 = sphi 0, %s89
      %s91 = sphi 0, %s89
      %s92 = sphi 0, %s91
      %s106 = sphi 0, %s92
      %s112 = sphi 0, %s114
      %s115 = sphi 0, %s112
      %s116 = sphi 0, %s115
      %s132 = sphi 0, %s116
    $region4: #{tpu_custom_call.1} parent=1 // loop_header_branch
      %16 = sbr.rel (%p14) target = $region8
    $region5: #{tpu_custom_call.1} parent=1 // loop_body
      %s18 = ssub.s32 %s13, 1
      %s19 = ssub.s32 %s13, 2
      %s20 = sadd.s32 %s13, 1
      %s21 = ssub.s32 %s13, %s20
      %p22 = scmp.eq.s32.totalorder %s21, 0
      %s24 = sadd.s32 %s23, 1
      %s25 = scalar_select %p22, %s23, %s24
      %p28 = pneg %p22
      %p29 = scmp.eq.s32.totalorder %s13, 1
      %p30 = por %p28, %p29
      %p31 = scmp.ne.s32.totalorder %s23, %s26
      %p32 = scmp.eq.s32.totalorder %s13, 0
      %p33 = por %p31, %p32
      %p34 = scmp.ne.s32.totalorder %s23, %s26
      %p35 = scmp.eq.s32.totalorder %s18, 1
      %p36 = por %p34, %p35
      %p37 = scmp.ne.s32.totalorder %s26, %s27
      %p38 = scmp.eq.s32.totalorder %s18, 0
      %p39 = por %p37, %p38
      %p40 = scmp.ne.s32.totalorder %s26, %s27
      %p41 = scmp.eq.s32.totalorder %s19, 1
      %p42 = por %p40, %p41
      %p44 = scmp.ne.s32.totalorder %s27, %s43
      %p45 = scmp.eq.s32.totalorder %s19, 0
      %p46 = por %p44, %p45
      %s48 = sadd.s32 %s47, 1
      %p51 = scmp.eq.s32.totalorder %s13, 1
      %p52 = scmp.ne.s32.totalorder %s47, %s49
      %p53 = scmp.eq.s32.totalorder %s13, 0
      %p54 = por %p52, %p53
      %p55 = scmp.ne.s32.totalorder %s47, %s49
      %p56 = scmp.eq.s32.totalorder %s18, 1
      %p57 = por %p55, %p56
      %p58 = scmp.ne.s32.totalorder %s49, %s50
      %p59 = scmp.eq.s32.totalorder %s18, 0
      %p60 = por %p58, %p59
      %p61 = scmp.ne.s32.totalorder %s49, %s50
      %p62 = scmp.eq.s32.totalorder %s19, 1
      %p63 = por %p61, %p62
      %p65 = scmp.ne.s32.totalorder %s50, %s64
      %p66 = scmp.eq.s32.totalorder %s19, 0
      %p67 = por %p65, %p66
      %s69 = sadd.s32 %s68, 1
      %p72 = scmp.eq.s32.totalorder %s13, 1
      %p73 = scmp.ne.s32.totalorder %s68, %s70
      %p74 = scmp.eq.s32.totalorder %s13, 0
      %p75 = por %p73, %p74
      %p76 = scmp.ne.s32.totalorder %s68, %s70
      %p77 = scmp.eq.s32.totalorder %s18, 1
      %p78 = por %p76, %p77
      %p79 = scmp.ne.s32.totalorder %s70, %s71
      %p80 = scmp.eq.s32.totalorder %s18, 0
      %p81 = por %p79, %p80
      %p82 = scmp.ne.s32.totalorder %s70, %s71
      %p83 = scmp.eq.s32.totalorder %s19, 1
      %p84 = por %p82, %p83
      %p86 = scmp.ne.s32.totalorder %s71, %s85
      %p87 = scmp.eq.s32.totalorder %s19, 0
      %p88 = por %p86, %p87
      %s90 = sadd.s32 %s89, 1
      %p93 = scmp.eq.s32.totalorder %s13, 1
      %p94 = scmp.ne.s32.totalorder %s89, %s91
      %p95 = scmp.eq.s32.totalorder %s13, 0
      %p96 = por %p94, %p95
      %p97 = scmp.ne.s32.totalorder %s89, %s91
      %p98 = scmp.eq.s32.totalorder %s18, 1
      %p99 = por %p97, %p98
      %p100 = scmp.ne.s32.totalorder %s91, %s92
      %p101 = scmp.eq.s32.totalorder %s18, 0
      %p102 = por %p100, %p101
      %p103 = scmp.ne.s32.totalorder %s91, %s92
      %p104 = scmp.eq.s32.totalorder %s19, 1
      %p105 = por %p103, %p104
      %p107 = scmp.ne.s32.totalorder %s92, %s106
      %p108 = scmp.eq.s32.totalorder %s19, 0
      %p109 = por %p107, %p108
      %s110 = ssub.s32 %s13, %s20
      %p111 = scmp.eq.s32.totalorder %s110, 0
      %s113 = sadd.s32 %s112, 1
      %s114 = scalar_select %p111, %s112, %s113
      %p117 = pneg %p111
      %p118 = scmp.eq.s32.totalorder %s13, 1
      %p119 = por %p117, %p118
      %p120 = scmp.ne.s32.totalorder %s112, %s115
      %p121 = scmp.eq.s32.totalorder %s13, 0
      %p122 = por %p120, %p121
      %p123 = scmp.ne.s32.totalorder %s112, %s115
      %p124 = scmp.eq.s32.totalorder %s18, 1
      %p125 = por %p123, %p124
      %p126 = scmp.ne.s32.totalorder %s115, %s116
      %p127 = scmp.eq.s32.totalorder %s18, 0
      %p128 = por %p126, %p127
      %p129 = scmp.ne.s32.totalorder %s115, %s116
      %p130 = scmp.eq.s32.totalorder %s19, 1
      %p131 = por %p129, %p130
      %p133 = scmp.ne.s32.totalorder %s116, %s132
      %p134 = scmp.eq.s32.totalorder %s19, 0
      %p135 = por %p133, %p134
      %p136 = scmp.le.s32.totalorder 1, %s13
      %p137 = scmp.lt.s32.totalorder %s13, 3
      %p138 = pnand %p136, %p137
      %p139 = pneg %p138
      // Predicated region
      $region9: #{tpu_custom_call.1} parent=5 // pred_check
        _
      $region10: #{tpu_custom_call.1} parent=5 // pred_check_branch
        %141 = sbr.rel (%p138) target = $region12
      $region11: #{tpu_custom_call.1} parent=5 // pred_region
        %s142 = ssub.s32 %s13, 1
        // Predicated region
        $region13: #{tpu_custom_call.1} parent=11 // pred_check
          %p143 = pneg %p60
        $region14: #{tpu_custom_call.1} parent=11 // pred_check_branch
          %145 = sbr.rel (%p143) target = $region16
        $region15: #{tpu_custom_call.1} parent=11 // pred_region
          _
        $region16: #{tpu_custom_call.1} parent=11 // pred_fallthru
          _
        // Predicated region
        $region17: #{tpu_custom_call.1} parent=11 // pred_check
          %p146 = pneg %p81
        $region18: #{tpu_custom_call.1} parent=11 // pred_check_branch
          %148 = sbr.rel (%p146) target = $region20
        $region19: #{tpu_custom_call.1} parent=11 // pred_region
          _
        $region20: #{tpu_custom_call.1} parent=11 // pred_fallthru
          _
        // Predicated region
        $region21: #{tpu_custom_call.1} parent=11 // pred_check
          %p149 = pneg %p102
        $region22: #{tpu_custom_call.1} parent=11 // pred_check_branch
          %151 = sbr.rel (%p149) target = $region24
        $region23: #{tpu_custom_call.1} parent=11 // pred_region
          _
        $region24: #{tpu_custom_call.1} parent=11 // pred_fallthru
          _
      $region12: #{tpu_custom_call.1} parent=5 // pred_fallthru
        _
      %p152 = scmp.lt.s32.totalorder %s13, 2
      // Predicated region
      $region25: #{tpu_custom_call.1} parent=5 // pred_check
        %p153 = pneg %p152
      $region26: #{tpu_custom_call.1} parent=5 // pred_check_branch
        %155 = sbr.rel (%p153) target = $region28
      $region27: #{tpu_custom_call.1} parent=5 // pred_region
        // Predicated region
        $region29: #{tpu_custom_call.1} parent=27 // pred_check
          %p156 = pneg %p33
        $region30: #{tpu_custom_call.1} parent=27 // pred_check_branch
          %158 = sbr.rel (%p156) target = $region32
        $region31: #{tpu_custom_call.1} parent=27 // pred_region
          %p159 = scmp.lt.s32.totalorder %s13, 1
          %s160 = scalar_select %p159, %s13, 1
          %s161 = smul.addr %s160, 8
          %s162 = scalar_lea.vmem %s0, %s161
        $region32: #{tpu_custom_call.1} parent=27 // pred_fallthru
          _
      $region28: #{tpu_custom_call.1} parent=5 // pred_fallthru
        _
      %p163 = scmp.le.s32.totalorder 1, %s13
      %p164 = scmp.lt.s32.totalorder %s13, 3
      %p165 = pnand %p163, %p164
      %p166 = pneg %p165
      // Predicated region
      $region33: #{tpu_custom_call.1} parent=5 // pred_check
        _
      $region34: #{tpu_custom_call.1} parent=5 // pred_check_branch
        %168 = sbr.rel (%p165) target = $region36
      $region35: #{tpu_custom_call.1} parent=5 // pred_region
        %s169 = ssub.s32 %s13, 1
        %p170 = scmp.lt.s32.totalorder %s18, 1
        %s171 = scalar_select %p170, %s18, 1
        %s172 = smul.addr %s171, 8
        %s173 = scalar_lea.vmem %s0, %s172
        %p174 = pneg %p39
        %p175 = pneg %p36
        %p176 = pneg %p60
        %p177 = pneg %p57
        %p178 = pneg %p81
        %p179 = pneg %p78
        %p180 = pneg %p102
        %p181 = pneg %p99
        %p182 = pneg %p128
        %p183 = pneg %p125
        %s184 = sand.u32 %s115, 1
        %s185 = scalar_lea.sflag [#allocation6], %s184
        %s186 = sand.u32 %s115, 1
        %s187 = smul.addr %s186, 8
        %s188 = scalar_lea.vmem [#allocation5], %s187
        %p189 = scmp.lt.s32.totalorder %s18, 1
        %s190 = scalar_select %p189, %s18, 1
        %s191 = smul.addr %s190, 8
        %s192 = scalar_lea.vmem %s0, %s191
        %v194 = vld [vmem:[%s192] sm:$0xff]
        %v195 = vpack.c.bf16 %v194, %v194
        %v196 = vld [vmem:[%s1] sm:$0xff]
        %v197 = vld [vmem:[%s1 + $0x8] sm:$0xf]
        %v198 = vld [vmem:[%s1 + $0xc] sm:$0xff]
        %v199 = vld [vmem:[%s1 + $0x14] sm:$0xf]
        %v200 = vld [vmem:[%s1 + $0x18] sm:$0xff]
        %v201 = vld [vmem:[%s1 + $0x20] sm:$0xf]
        %v202 = vld [vmem:[%s1 + $0x24] sm:$0xff]
        %v203 = vld [vmem:[%s1 + $0x2c] sm:$0xf]
        %v212 = vunpack.c.l.b16 %v196
        %v213 = vunpack.c.h.b16 %v196
        %v214 = vunpack.c.l.b16 %v197
        %v215 = vunpack.c.l.b16 %v198
        %v216 = vunpack.c.h.b16 %v198
        %v217 = vunpack.c.l.b16 %v199
        %v218 = vunpack.c.l.b16 %v200
        %v219 = vunpack.c.h.b16 %v200
        %v220 = vunpack.c.l.b16 %v201
        %v221 = vunpack.c.l.b16 %v202
        %v222 = vunpack.c.h.b16 %v202
        %v223 = vunpack.c.l.b16 %v203
        %v224 = vpack.c.b16 %v215, %v212
        %v225 = vpack.c.b16 %v216, %v213
        %v226 = vpack.c.b16 %v217, %v214
        %v227 = vpack.c.b16 %v221, %v218
        %v228 = vpack.c.b16 %v222, %v219
        %v229 = vpack.c.b16 %v223, %v220
        %vm236 = vcmask 261120
        %v238 = vsel %vm236, %v195, 0
        %240 = vmatprep.subr.bf16.mxu0 0
        %241 = vmatpush1.bf16.msra.mxu0 0
        %242 = vmatprep.subr.bf16.mxu0 0
        %243 = vmatpush1.bf16.msra.mxu0 0
        %244 = vmatprep.subr.bf16.mxu0 0
        %245 = vmatpush1.bf16.msra.mxu0 0
        %246 = vmatprep.subr.bf16.mxu0 0
        %247 = vmatpush1.bf16.msra.mxu0 0
        %248 = vmatprep.subr.bf16.mxu0 0
        %249 = vmatpush1.bf16.msra.mxu0 0
        %250 = vmatprep.subr.bf16.mxu0 0
        %251 = vmatpush1.bf16.msra.mxu0 0
        %252 = vmatprep.subr.bf16.mxu0 %v228
        %253 = vmatpush1.bf16.msra.mxu0 %v227
        %254 = vmatprep.subr.bf16.mxu0 %v225
        %255 = vmatpush1.bf16.msra.mxu0 %v224
        %256 = vmatprep.subr.bf16.mxu0 0
        %257 = vmatpush2.bf16.msra.mxu0 0
        %258 = vmatprep.subr.bf16.mxu0 0
        %259 = vmatpush2.bf16.msra.mxu0 0
        %260 = vmatprep.subr.bf16.mxu0 0
        %261 = vmatpush2.bf16.msra.mxu0 0
        %262 = vmatprep.subr.bf16.mxu0 0
        %263 = vmatpush2.bf16.msra.mxu0 0
        %264 = vmatprep.subr.bf16.mxu0 0
        %265 = vmatpush2.bf16.msra.mxu0 0
        %266 = vmatprep.subr.bf16.mxu0 0
        %267 = vmatpush2.bf16.msra.mxu0 0
        %268 = vmatprep.subr.bf16.mxu0 0
        %269 = vmatpush2.bf16.msra.mxu0 0
        %270 = vmatprep.subr.bf16.mxu0 0
        %271 = vmatpush2.bf16.msra.mxu0 0
        %272 = vmatprep.mubr.bf16.mxu0 0
        %273 = vmatmul.mubr.bf16.gmra.mxu0 %v238
        %v274 = vpop.f32.mrf.mxu0
        %v275 = vadd.f32 0.0, %v274
        %v276 = vpop.f32.mrf.mxu0
        %v277 = vadd.f32 0.0, %v276
        %v278 = vpop.f32.mrf.mxu0
        %v279 = vpop.f32.mrf.mxu0
        %280 = vdwg.mxu0
        %281 = vmatprep.subr.bf16.mxu0 0
        %282 = vmatpush1.bf16.msra.mxu0 0
        %283 = vmatprep.subr.bf16.mxu0 0
        %284 = vmatpush1.bf16.msra.mxu0 0
        %285 = vmatprep.subr.bf16.mxu0 0
        %286 = vmatpush1.bf16.msra.mxu0 0
        %287 = vmatprep.subr.bf16.mxu0 0
        %288 = vmatpush1.bf16.msra.mxu0 0
        %289 = vmatprep.subr.bf16.mxu0 0
        %290 = vmatpush1.bf16.msra.mxu0 0
        %291 = vmatprep.subr.bf16.mxu0 0
        %292 = vmatpush1.bf16.msra.mxu0 0
        %293 = vmatprep.subr.bf16.mxu0 0
        %294 = vmatpush1.bf16.msra.mxu0 %v229
        %295 = vmatprep.subr.bf16.mxu0 0
        %296 = vmatpush1.bf16.msra.mxu0 %v226
        %297 = vmatprep.subr.bf16.mxu0 0
        %298 = vmatpush2.bf16.msra.mxu0 0
        %299 = vmatprep.subr.bf16.mxu0 0
        %300 = vmatpush2.bf16.msra.mxu0 0
        %301 = vmatprep.subr.bf16.mxu0 0
        %302 = vmatpush2.bf16.msra.mxu0 0
        %303 = vmatprep.subr.bf16.mxu0 0
        %304 = vmatpush2.bf16.msra.mxu0 0
        %305 = vmatprep.subr.bf16.mxu0 0
        %306 = vmatpush2.bf16.msra.mxu0 0
        %307 = vmatprep.subr.bf16.mxu0 0
        %308 = vmatpush2.bf16.msra.mxu0 0
        %309 = vmatprep.subr.bf16.mxu0 0
        %310 = vmatpush2.bf16.msra.mxu0 0
        %311 = vmatprep.subr.bf16.mxu0 0
        %312 = vmatpush2.bf16.msra.mxu0 0
        %313 = vmatprep.mubr.bf16.mxu0 0
        %314 = vmatmul.mubr.bf16.gmra.mxu0 %v238
        %v315 = vpop.f32.mrf.mxu0
        %v316 = vadd.f32 0.0, %v315
        %v317 = vpop.f32.mrf.mxu0
        %v318 = vpop.f32.mrf.mxu0
        %v319 = vpop.f32.mrf.mxu0
        %320 = vdwg.mxu0
        %v321 = vpack.c.bf16 %v275, %v275
        %v322 = vpack.c.bf16 %v277, %v277
        %v323 = vpack.c.bf16 %v316, %v316
        %v327 = vunpack.c.l.b16 %v321
        %v328 = vunpack.c.l.b16 %v322
        %v329 = vunpack.c.l.b16 %v323
        %v330 = vpack.c.b16 %v328, %v327
        %v331 = vpack.c.b16 %v329, %v329
        %334 = vst [vmem:[#allocation2] sm:$0xff] %v330
        %335 = vst [vmem:[#allocation2 + $0x8] sm:$0xf] %v331
        %v336 = vld [vmem:[%s2] sm:$0xf]
        %v337 = vld [vmem:[%s2 + $0x4] sm:$0xf]
        %v338 = vld [vmem:[%s2 + $0x8] sm:$0xf]
        %v339 = vld [vmem:[%s2 + $0xc] sm:$0xf]
        %v344 = vunpack.c.l.b16 %v336
        %v345 = vunpack.c.l.b16 %v337
        %v346 = vunpack.c.l.b16 %v338
        %v347 = vunpack.c.l.b16 %v339
        %v348 = vpack.c.b16 %v345, %v344
        %v349 = vpack.c.b16 %v347, %v346
        %352 = vmatprep.subr.bf16.mxu0 0
        %353 = vmatpush1.bf16.msra.mxu0 0
        %354 = vmatprep.subr.bf16.mxu0 0
        %355 = vmatpush1.bf16.msra.mxu0 0
        %356 = vmatprep.subr.bf16.mxu0 0
        %357 = vmatpush1.bf16.msra.mxu0 0
        %358 = vmatprep.subr.bf16.mxu0 0
        %359 = vmatpush1.bf16.msra.mxu0 0
        %360 = vmatprep.subr.bf16.mxu0 0
        %361 = vmatpush1.bf16.msra.mxu0 0
        %362 = vmatprep.subr.bf16.mxu0 0
        %363 = vmatpush1.bf16.msra.mxu0 0
        %364 = vmatprep.subr.bf16.mxu0 0
        %365 = vmatpush1.bf16.msra.mxu0 %v349
        %366 = vmatprep.subr.bf16.mxu0 0
        %367 = vmatpush1.bf16.msra.mxu0 %v348
        %368 = vmatprep.subr.bf16.mxu0 0
        %369 = vmatpush2.bf16.msra.mxu0 0
        %370 = vmatprep.subr.bf16.mxu0 0
        %371 = vmatpush2.bf16.msra.mxu0 0
        %372 = vmatprep.subr.bf16.mxu0 0
        %373 = vmatpush2.bf16.msra.mxu0 0
        %374 = vmatprep.subr.bf16.mxu0 0
        %375 = vmatpush2.bf16.msra.mxu0 0
        %376 = vmatprep.subr.bf16.mxu0 0
        %377 = vmatpush2.bf16.msra.mxu0 0
        %378 = vmatprep.subr.bf16.mxu0 0
        %379 = vmatpush2.bf16.msra.mxu0 0
        %380 = vmatprep.subr.bf16.mxu0 0
        %381 = vmatpush2.bf16.msra.mxu0 0
        %382 = vmatprep.subr.bf16.mxu0 0
        %383 = vmatpush2.bf16.msra.mxu0 0
        %384 = vmatprep.mubr.bf16.mxu0 0
        %385 = vmatmul.mubr.bf16.gmra.mxu0 %v238
        %v386 = vpop.f32.mrf.mxu0
        %v387 = vadd.f32 0.0, %v386
        %v388 = vpop.f32.mrf.mxu0
        %v389 = vpop.f32.mrf.mxu0
        %v390 = vpop.f32.mrf.mxu0
        %391 = vdwg.mxu0
        %v392 = vxor.u32 %v387, 2147483648
        %v393 = vmul.f32 %v392, 1.442695
        %v394 = vpow.pop %v393
        %v395 = vadd.f32 %v394, 1.0
        %v396 = vrcp.pop %v395
        %v397 = vmul.f32 1.0, %v396
        %v398 = vmul.f32 %v387, %v397
        %399 = vst [vmem:[#allocation3] sm:$0xff] %v398
        %s400 = smul.u32 0, 3
        %s401 = smul.addr %s400, 4
        %s402 = scalar_lea.vmem [#allocation2], %s401
        %v403 = vld [vmem:[%s402] sm:$0xf]
        %v404 = vld [vmem:[%s402 + $0x4] sm:$0xf]
        %v405 = vld [vmem:[%s402 + $0x8] sm:$0xf]
        %v407 = vsel %vm236, %v403, 0
        %v410 = vsel %vm236, %v404, 0
        %412 = vmatprep.subr.bf16.mxu0 0
        %413 = vmatpush1.bf16.xpose.msra.mxu0 0
        %414 = vmatprep.subr.bf16.mxu0 0
        %415 = vmatpush1.bf16.xpose.msra.mxu0 0
        %416 = vmatprep.subr.bf16.mxu0 0
        %417 = vmatpush1.bf16.xpose.msra.mxu0 0
        %418 = vmatprep.subr.bf16.mxu0 0
        %419 = vmatpush1.bf16.xpose.msra.mxu0 0
        %420 = vmatprep.subr.bf16.mxu0 0
        %421 = vmatpush1.bf16.xpose.msra.mxu0 0
        %422 = vmatprep.subr.bf16.mxu0 0
        %423 = vmatpush1.bf16.xpose.msra.mxu0 0
        %424 = vmatprep.subr.bf16.mxu0 0
        %425 = vmatpush1.bf16.xpose.msra.mxu0 0
        %426 = vmatprep.subr.bf16.mxu0 0
        %427 = vmatpush1.bf16.xpose.msra.mxu0 %v410
        %428 = vmatprep.subr.bf16.mxu0 0
        %429 = vmatpush2.bf16.xpose.msra.mxu0 0
        %430 = vmatprep.subr.bf16.mxu0 0
        %431 = vmatpush2.bf16.xpose.msra.mxu0 0
        %432 = vmatprep.subr.bf16.mxu0 0
        %433 = vmatpush2.bf16.xpose.msra.mxu0 0
        %434 = vmatprep.subr.bf16.mxu0 0
        %435 = vmatpush2.bf16.xpose.msra.mxu0 0
        %436 = vmatprep.subr.bf16.mxu0 0
        %437 = vmatpush2.bf16.xpose.msra.mxu0 0
        %438 = vmatprep.subr.bf16.mxu0 0
        %439 = vmatpush2.bf16.xpose.msra.mxu0 0
        %440 = vmatprep.subr.bf16.mxu0 0
        %441 = vmatpush2.bf16.xpose.msra.mxu0 0
        %442 = vmatprep.subr.bf16.mxu0 0
        %443 = vmatpush2.bf16.xpose.msra.mxu0 0
        %444 = vmatprep.mubr.bf16.mxu0 0
        %445 = vmatmul.mubr.bf16.gmra.mxu0 %v407
        %v446 = vpop.f32.mrf.mxu0
        %v447 = vadd.f32 0.0, %v446
        %v448 = vpop.f32.mrf.mxu0
        %v449 = vpop.f32.mrf.mxu0
        %v450 = vpop.f32.mrf.mxu0
        %451 = vdwg.mxu0
        %vm452 = vcmask 64512
        %v453 = vsel %vm452, %v447, -inf
        %454 = vmax.xlane.f32.xlu0 %v453
        %v455 = vpop.xlane.xlu0 %454
        %v456 = vsub.f32 %v447, %v455
        %v457 = vmul.f32 %v456, 1.442695
        %v458 = vpow.pop %v457
        %v459 = vsel %vm452, %v458, 0.0
        %460 = vadd.xlane.f32.xlu0 %v459
        %v461 = vpop.xlane.xlu0 %460
        %v462 = vpack.c.bf16 %v458, %v458
        %v464 = vsel %vm452, %v462, 0
        %vm466 = vcmask 1043456
        %v468 = vsel %vm466, %v405, 0
        %470 = vmatprep.subr.bf16.mxu0 0
        %471 = vmatpush1.bf16.msra.mxu0 0
        %472 = vmatprep.subr.bf16.mxu0 0
        %473 = vmatpush1.bf16.msra.mxu0 0
        %474 = vmatprep.subr.bf16.mxu0 0
        %475 = vmatpush1.bf16.msra.mxu0 0
        %476 = vmatprep.subr.bf16.mxu0 0
        %477 = vmatpush1.bf16.msra.mxu0 0
        %478 = vmatprep.subr.bf16.mxu0 0
        %479 = vmatpush1.bf16.msra.mxu0 0
        %480 = vmatprep.subr.bf16.mxu0 0
        %481 = vmatpush1.bf16.msra.mxu0 0
        %482 = vmatprep.subr.bf16.mxu0 0
        %483 = vmatpush1.bf16.msra.mxu0 0
        %484 = vmatprep.subr.bf16.mxu0 0
        %485 = vmatpush1.bf16.msra.mxu0 %v468
        %486 = vmatprep.subr.bf16.mxu0 0
        %487 = vmatpush2.bf16.msra.mxu0 0
        %488 = vmatprep.subr.bf16.mxu0 0
        %489 = vmatpush2.bf16.msra.mxu0 0
        %490 = vmatprep.subr.bf16.mxu0 0
        %491 = vmatpush2.bf16.msra.mxu0 0
        %492 = vmatprep.subr.bf16.mxu0 0
        %493 = vmatpush2.bf16.msra.mxu0 0
        %494 = vmatprep.subr.bf16.mxu0 0
        %495 = vmatpush2.bf16.msra.mxu0 0
        %496 = vmatprep.subr.bf16.mxu0 0
        %497 = vmatpush2.bf16.msra.mxu0 0
        %498 = vmatprep.subr.bf16.mxu0 0
        %499 = vmatpush2.bf16.msra.mxu0 0
        %500 = vmatprep.subr.bf16.mxu0 0
        %501 = vmatpush2.bf16.msra.mxu0 0
        %502 = vmatprep.mubr.bf16.mxu0 0
        %503 = vmatmul.mubr.bf16.gmra.mxu0 %v464
        %v504 = vpop.f32.mrf.mxu0
        %v505 = vadd.f32 0.0, %v504
        %v506 = vpop.f32.mrf.mxu0
        %v507 = vpop.f32.mrf.mxu0
        %v508 = vpop.f32.mrf.mxu0
        %509 = vdwg.mxu0
        %v510 = vrcp.pop %v461
        %v511 = vmul.f32 %v505, %v510
        %v512 = vld [vmem:[#allocation3] sm:$0xff]
        %v513 = vmul.f32 %v511, %v512
        %v514 = vpack.c.bf16 %v513, %v513
        %vm515 = vcmask 257024
        %516 = vst.msk [vmem:[#allocation4] sm:$0xf] %vm515, %v514
        %v517 = vld [vmem:[%s402] sm:$0xf]
        %v518 = vld [vmem:[%s402 + $0x4] sm:$0xf]
        %v519 = vld [vmem:[%s402 + $0x8] sm:$0xf]
        %v521 = vunpack.c.l.b16 %v517
        %v522 = vpack.c.b16 %v521, %v521
        %523 = vrot.lane.b32.xlu0 %v522, 96
        %v524 = vpop.permute.xlu0 %523
        %v526 = vunpack.c.l.b16 %v518
        %v527 = vpack.c.b16 %v526, %v526
        %528 = vrot.lane.b32.xlu0 %v527, 96
        %v529 = vpop.permute.xlu0 %528
        %v531 = vsel %vm236, %v524, 0
        %v534 = vsel %vm236, %v529, 0
        %536 = vmatprep.subr.bf16.mxu0 0
        %537 = vmatpush1.bf16.xpose.msra.mxu0 0
        %538 = vmatprep.subr.bf16.mxu0 0
        %539 = vmatpush1.bf16.xpose.msra.mxu0 0
        %540 = vmatprep.subr.bf16.mxu0 0
        %541 = vmatpush1.bf16.xpose.msra.mxu0 0
        %542 = vmatprep.subr.bf16.mxu0 0
        %543 = vmatpush1.bf16.xpose.msra.mxu0 0
        %544 = vmatprep.subr.bf16.mxu0 0
        %545 = vmatpush1.bf16.xpose.msra.mxu0 0
        %546 = vmatprep.subr.bf16.mxu0 0
        %547 = vmatpush1.bf16.xpose.msra.mxu0 0
        %548 = vmatprep.subr.bf16.mxu0 0
        %549 = vmatpush1.bf16.xpose.msra.mxu0 0
        %550 = vmatprep.subr.bf16.mxu0 0
        %551 = vmatpush1.bf16.xpose.msra.mxu0 %v534
        %552 = vmatprep.subr.bf16.mxu0 0
        %553 = vmatpush2.bf16.xpose.msra.mxu0 0
        %554 = vmatprep.subr.bf16.mxu0 0
        %555 = vmatpush2.bf16.xpose.msra.mxu0 0
        %556 = vmatprep.subr.bf16.mxu0 0
        %557 = vmatpush2.bf16.xpose.msra.mxu0 0
        %558 = vmatprep.subr.bf16.mxu0 0
        %559 = vmatpush2.bf16.xpose.msra.mxu0 0
        %560 = vmatprep.subr.bf16.mxu0 0
        %561 = vmatpush2.bf16.xpose.msra.mxu0 0
        %562 = vmatprep.subr.bf16.mxu0 0
        %563 = vmatpush2.bf16.xpose.msra.mxu0 0
        %564 = vmatprep.subr.bf16.mxu0 0
        %565 = vmatpush2.bf16.xpose.msra.mxu0 0
        %566 = vmatprep.subr.bf16.mxu0 0
        %567 = vmatpush2.bf16.xpose.msra.mxu0 0
        %568 = vmatprep.mubr.bf16.mxu0 0
        %569 = vmatmul.mubr.bf16.gmra.mxu0 %v531
        %v570 = vpop.f32.mrf.mxu0
        %v571 = vadd.f32 0.0, %v570
        %v572 = vpop.f32.mrf.mxu0
        %v573 = vpop.f32.mrf.mxu0
        %v574 = vpop.f32.mrf.mxu0
        %575 = vdwg.mxu0
        %v576 = vsel %vm452, %v571, -inf
        %577 = vmax.xlane.f32.xlu0 %v576
        %v578 = vpop.xlane.xlu0 %577
        %v579 = vsub.f32 %v571, %v578
        %v580 = vmul.f32 %v579, 1.442695
        %v581 = vpow.pop %v580
        %v582 = vsel %vm452, %v581, 0.0
        %583 = vadd.xlane.f32.xlu0 %v582
        %v584 = vpop.xlane.xlu0 %583
        %v585 = vpack.c.bf16 %v581, %v581
        %v587 = vunpack.c.l.b16 %v519
        %v588 = vpack.c.b16 %v587, %v587
        %589 = vrot.lane.b32.xlu0 %v588, 96
        %v590 = vpop.permute.xlu0 %589
        %v592 = vsel %vm452, %v585, 0
        %v595 = vsel %vm466, %v590, 0
        %597 = vmatprep.subr.bf16.mxu0 0
        %598 = vmatpush1.bf16.msra.mxu0 0
        %599 = vmatprep.subr.bf16.mxu0 0
        %600 = vmatpush1.bf16.msra.mxu0 0
        %601 = vmatprep.subr.bf16.mxu0 0
        %602 = vmatpush1.bf16.msra.mxu0 0
        %603 = vmatprep.subr.bf16.mxu0 0
        %604 = vmatpush1.bf16.msra.mxu0 0
        %605 = vmatprep.subr.bf16.mxu0 0
        %606 = vmatpush1.bf16.msra.mxu0 0
        %607 = vmatprep.subr.bf16.mxu0 0
        %608 = vmatpush1.bf16.msra.mxu0 0
        %609 = vmatprep.subr.bf16.mxu0 0
        %610 = vmatpush1.bf16.msra.mxu0 0
        %611 = vmatprep.subr.bf16.mxu0 0
        %612 = vmatpush1.bf16.msra.mxu0 %v595
        %613 = vmatprep.subr.bf16.mxu0 0
        %614 = vmatpush2.bf16.msra.mxu0 0
        %615 = vmatprep.subr.bf16.mxu0 0
        %616 = vmatpush2.bf16.msra.mxu0 0
        %617 = vmatprep.subr.bf16.mxu0 0
        %618 = vmatpush2.bf16.msra.mxu0 0
        %619 = vmatprep.subr.bf16.mxu0 0
        %620 = vmatpush2.bf16.msra.mxu0 0
        %621 = vmatprep.subr.bf16.mxu0 0
        %622 = vmatpush2.bf16.msra.mxu0 0
        %623 = vmatprep.subr.bf16.mxu0 0
        %624 = vmatpush2.bf16.msra.mxu0 0
        %625 = vmatprep.subr.bf16.mxu0 0
        %626 = vmatpush2.bf16.msra.mxu0 0
        %627 = vmatprep.subr.bf16.mxu0 0
        %628 = vmatpush2.bf16.msra.mxu0 0
        %629 = vmatprep.mubr.bf16.mxu0 0
        %630 = vmatmul.mubr.bf16.gmra.mxu0 %v592
        %v631 = vpop.f32.mrf.mxu0
        %v632 = vadd.f32 0.0, %v631
        %v633 = vpop.f32.mrf.mxu0
        %v634 = vpop.f32.mrf.mxu0
        %v635 = vpop.f32.mrf.mxu0
        %636 = vdwg.mxu0
        %v637 = vrcp.pop %v584
        %v638 = vmul.f32 %v632, %v637
        %v639 = vld [vmem:[#allocation3] sm:$0xff]
        %641 = vrot.lane.b32.xlu0 %v639, 96
        %v642 = vpop.permute.xlu0 %641
        %v644 = vmul.f32 %v638, %v642
        %v645 = vpack.c.bf16 %v644, %v644
        %v647 = vunpack.c.l.b16 %v645
        %v648 = vpack.c.b16 %v647, %v647
        %649 = vrot.lane.b32.xlu0 %v648, 32
        %v650 = vpop.permute.xlu0 %649
        %vm652 = vcmask 519424
        %653 = vst.msk [vmem:[#allocation4] sm:$0xf] %vm652, %v650
        %v654 = vld [vmem:[%s402] sm:$0xf]
        %v655 = vld [vmem:[%s402 + $0x4] sm:$0xf]
        %v656 = vld [vmem:[%s402 + $0x8] sm:$0xf]
        %v658 = vunpack.c.l.b16 %v654
        %v659 = vpack.c.b16 %v658, %v658
        %660 = vrot.lane.b32.xlu0 %v659, 64
        %v661 = vpop.permute.xlu0 %660
        %v663 = vunpack.c.l.b16 %v655
        %v664 = vpack.c.b16 %v663, %v663
        %665 = vrot.lane.b32.xlu0 %v664, 64
        %v666 = vpop.permute.xlu0 %665
        %v668 = vsel %vm236, %v661, 0
        %v671 = vsel %vm236, %v666, 0
        %673 = vmatprep.subr.bf16.mxu0 0
        %674 = vmatpush1.bf16.xpose.msra.mxu0 0
        %675 = vmatprep.subr.bf16.mxu0 0
        %676 = vmatpush1.bf16.xpose.msra.mxu0 0
        %677 = vmatprep.subr.bf16.mxu0 0
        %678 = vmatpush1.bf16.xpose.msra.mxu0 0
        %679 = vmatprep.subr.bf16.mxu0 0
        %680 = vmatpush1.bf16.xpose.msra.mxu0 0
        %681 = vmatprep.subr.bf16.mxu0 0
        %682 = vmatpush1.bf16.xpose.msra.mxu0 0
        %683 = vmatprep.subr.bf16.mxu0 0
        %684 = vmatpush1.bf16.xpose.msra.mxu0 0
        %685 = vmatprep.subr.bf16.mxu0 0
        %686 = vmatpush1.bf16.xpose.msra.mxu0 0
        %687 = vmatprep.subr.bf16.mxu0 0
        %688 = vmatpush1.bf16.xpose.msra.mxu0 %v671
        %689 = vmatprep.subr.bf16.mxu0 0
        %690 = vmatpush2.bf16.xpose.msra.mxu0 0
        %691 = vmatprep.subr.bf16.mxu0 0
        %692 = vmatpush2.bf16.xpose.msra.mxu0 0
        %693 = vmatprep.subr.bf16.mxu0 0
        %694 = vmatpush2.bf16.xpose.msra.mxu0 0
        %695 = vmatprep.subr.bf16.mxu0 0
        %696 = vmatpush2.bf16.xpose.msra.mxu0 0
        %697 = vmatprep.subr.bf16.mxu0 0
        %698 = vmatpush2.bf16.xpose.msra.mxu0 0
        %699 = vmatprep.subr.bf16.mxu0 0
        %700 = vmatpush2.bf16.xpose.msra.mxu0 0
        %701 = vmatprep.subr.bf16.mxu0 0
        %702 = vmatpush2.bf16.xpose.msra.mxu0 0
        %703 = vmatprep.subr.bf16.mxu0 0
        %704 = vmatpush2.bf16.xpose.msra.mxu0 0
        %705 = vmatprep.mubr.bf16.mxu0 0
        %706 = vmatmul.mubr.bf16.gmra.mxu0 %v668
        %v707 = vpop.f32.mrf.mxu0
        %v708 = vadd.f32 0.0, %v707
        %v709 = vpop.f32.mrf.mxu0
        %v710 = vpop.f32.mrf.mxu0
        %v711 = vpop.f32.mrf.mxu0
        %712 = vdwg.mxu0
        %v713 = vsel %vm452, %v708, -inf
        %714 = vmax.xlane.f32.xlu0 %v713
        %v715 = vpop.xlane.xlu0 %714
        %v716 = vsub.f32 %v708, %v715
        %v717 = vmul.f32 %v716, 1.442695
        %v718 = vpow.pop %v717
        %v719 = vsel %vm452, %v718, 0.0
        %720 = vadd.xlane.f32.xlu0 %v719
        %v721 = vpop.xlane.xlu0 %720
        %v722 = vpack.c.bf16 %v718, %v718
        %v724 = vunpack.c.l.b16 %v656
        %v725 = vpack.c.b16 %v724, %v724
        %726 = vrot.lane.b32.xlu0 %v725, 64
        %v727 = vpop.permute.xlu0 %726
        %v729 = vsel %vm452, %v722, 0
        %v732 = vsel %vm466, %v727, 0
        %734 = vmatprep.subr.bf16.mxu0 0
        %735 = vmatpush1.bf16.msra.mxu0 0
        %736 = vmatprep.subr.bf16.mxu0 0
        %737 = vmatpush1.bf16.msra.mxu0 0
        %738 = vmatprep.subr.bf16.mxu0 0
        %739 = vmatpush1.bf16.msra.mxu0 0
        %740 = vmatprep.subr.bf16.mxu0 0
        %741 = vmatpush1.bf16.msra.mxu0 0
        %742 = vmatprep.subr.bf16.mxu0 0
        %743 = vmatpush1.bf16.msra.mxu0 0
        %744 = vmatprep.subr.bf16.mxu0 0
        %745 = vmatpush1.bf16.msra.mxu0 0
        %746 = vmatprep.subr.bf16.mxu0 0
        %747 = vmatpush1.bf16.msra.mxu0 0
        %748 = vmatprep.subr.bf16.mxu0 0
        %749 = vmatpush1.bf16.msra.mxu0 %v732
        %750 = vmatprep.subr.bf16.mxu0 0
        %751 = vmatpush2.bf16.msra.mxu0 0
        %752 = vmatprep.subr.bf16.mxu0 0
        %753 = vmatpush2.bf16.msra.mxu0 0
        %754 = vmatprep.subr.bf16.mxu0 0
        %755 = vmatpush2.bf16.msra.mxu0 0
        %756 = vmatprep.subr.bf16.mxu0 0
        %757 = vmatpush2.bf16.msra.mxu0 0
        %758 = vmatprep.subr.bf16.mxu0 0
        %759 = vmatpush2.bf16.msra.mxu0 0
        %760 = vmatprep.subr.bf16.mxu0 0
        %761 = vmatpush2.bf16.msra.mxu0 0
        %762 = vmatprep.subr.bf16.mxu0 0
        %763 = vmatpush2.bf16.msra.mxu0 0
        %764 = vmatprep.subr.bf16.mxu0 0
        %765 = vmatpush2.bf16.msra.mxu0 0
        %766 = vmatprep.mubr.bf16.mxu0 0
        %767 = vmatmul.mubr.bf16.gmra.mxu0 %v729
        %v768 = vpop.f32.mrf.mxu0
        %v769 = vadd.f32 0.0, %v768
        %v770 = vpop.f32.mrf.mxu0
        %v771 = vpop.f32.mrf.mxu0
        %v772 = vpop.f32.mrf.mxu0
        %773 = vdwg.mxu0
        %v774 = vrcp.pop %v721
        %v775 = vmul.f32 %v769, %v774
        %v776 = vld [vmem:[#allocation3] sm:$0xff]
        %778 = vrot.lane.b32.xlu0 %v776, 64
        %v779 = vpop.permute.xlu0 %778
        %v781 = vmul.f32 %v775, %v779
        %v782 = vpack.c.bf16 %v781, %v781
        %v784 = vunpack.c.l.b16 %v782
        %v785 = vpack.c.b16 %v784, %v784
        %786 = vrot.lane.b32.xlu0 %v785, 64
        %v787 = vpop.permute.xlu0 %786
        %vm789 = vcmask 781824
        %790 = vst.msk [vmem:[#allocation4] sm:$0xf] %vm789, %v787
        %v791 = vld [vmem:[%s402] sm:$0xf]
        %v792 = vld [vmem:[%s402 + $0x4] sm:$0xf]
        %v793 = vld [vmem:[%s402 + $0x8] sm:$0xf]
        %v795 = vunpack.c.l.b16 %v791
        %v796 = vpack.c.b16 %v795, %v795
        %797 = vrot.lane.b32.xlu0 %v796, 32
        %v798 = vpop.permute.xlu0 %797
        %v800 = vunpack.c.l.b16 %v792
        %v801 = vpack.c.b16 %v800, %v800
        %802 = vrot.lane.b32.xlu0 %v801, 32
        %v803 = vpop.permute.xlu0 %802
        %v805 = vsel %vm236, %v798, 0
        %v808 = vsel %vm236, %v803, 0
        %810 = vmatprep.subr.bf16.mxu0 0
        %811 = vmatpush1.bf16.xpose.msra.mxu0 0
        %812 = vmatprep.subr.bf16.mxu0 0
        %813 = vmatpush1.bf16.xpose.msra.mxu0 0
        %814 = vmatprep.subr.bf16.mxu0 0
        %815 = vmatpush1.bf16.xpose.msra.mxu0 0
        %816 = vmatprep.subr.bf16.mxu0 0
        %817 = vmatpush1.bf16.xpose.msra.mxu0 0
        %818 = vmatprep.subr.bf16.mxu0 0
        %819 = vmatpush1.bf16.xpose.msra.mxu0 0
        %820 = vmatprep.subr.bf16.mxu0 0
        %821 = vmatpush1.bf16.xpose.msra.mxu0 0
        %822 = vmatprep.subr.bf16.mxu0 0
        %823 = vmatpush1.bf16.xpose.msra.mxu0 0
        %824 = vmatprep.subr.bf16.mxu0 0
        %825 = vmatpush1.bf16.xpose.msra.mxu0 %v808
        %826 = vmatprep.subr.bf16.mxu0 0
        %827 = vmatpush2.bf16.xpose.msra.mxu0 0
        %828 = vmatprep.subr.bf16.mxu0 0
        %829 = vmatpush2.bf16.xpose.msra.mxu0 0
        %830 = vmatprep.subr.bf16.mxu0 0
        %831 = vmatpush2.bf16.xpose.msra.mxu0 0
        %832 = vmatprep.subr.bf16.mxu0 0
        %833 = vmatpush2.bf16.xpose.msra.mxu0 0
        %834 = vmatprep.subr.bf16.mxu0 0
        %835 = vmatpush2.bf16.xpose.msra.mxu0 0
        %836 = vmatprep.subr.bf16.mxu0 0
        %837 = vmatpush2.bf16.xpose.msra.mxu0 0
        %838 = vmatprep.subr.bf16.mxu0 0
        %839 = vmatpush2.bf16.xpose.msra.mxu0 0
        %840 = vmatprep.subr.bf16.mxu0 0
        %841 = vmatpush2.bf16.xpose.msra.mxu0 0
        %842 = vmatprep.mubr.bf16.mxu0 0
        %843 = vmatmul.mubr.bf16.gmra.mxu0 %v805
        %v844 = vpop.f32.mrf.mxu0
        %v845 = vadd.f32 0.0, %v844
        %v846 = vpop.f32.mrf.mxu0
        %v847 = vpop.f32.mrf.mxu0
        %v848 = vpop.f32.mrf.mxu0
        %849 = vdwg.mxu0
        %v850 = vsel %vm452, %v845, -inf
        %851 = vmax.xlane.f32.xlu0 %v850
        %v852 = vpop.xlane.xlu0 %851
        %v853 = vsub.f32 %v845, %v852
        %v854 = vmul.f32 %v853, 1.442695
        %v855 = vpow.pop %v854
        %v856 = vsel %vm452, %v855, 0.0
        %857 = vadd.xlane.f32.xlu0 %v856
        %v858 = vpop.xlane.xlu0 %857
        %v859 = vpack.c.bf16 %v855, %v855
        %v861 = vunpack.c.l.b16 %v793
        %v862 = vpack.c.b16 %v861, %v861
        %863 = vrot.lane.b32.xlu0 %v862, 32
        %v864 = vpop.permute.xlu0 %863
        %v866 = vsel %vm452, %v859, 0
        %v869 = vsel %vm466, %v864, 0
        %871 = vmatprep.subr.bf16.mxu0 0
        %872 = vmatpush1.bf16.msra.mxu0 0
        %873 = vmatprep.subr.bf16.mxu0 0
        %874 = vmatpush1.bf16.msra.mxu0 0
        %875 = vmatprep.subr.bf16.mxu0 0
        %876 = vmatpush1.bf16.msra.mxu0 0
        %877 = vmatprep.subr.bf16.mxu0 0
        %878 = vmatpush1.bf16.msra.mxu0 0
        %879 = vmatprep.subr.bf16.mxu0 0
        %880 = vmatpush1.bf16.msra.mxu0 0
        %881 = vmatprep.subr.bf16.mxu0 0
        %882 = vmatpush1.bf16.msra.mxu0 0
        %883 = vmatprep.subr.bf16.mxu0 0
        %884 = vmatpush1.bf16.msra.mxu0 0
        %885 = vmatprep.subr.bf16.mxu0 0
        %886 = vmatpush1.bf16.msra.mxu0 %v869
        %887 = vmatprep.subr.bf16.mxu0 0
        %888 = vmatpush2.bf16.msra.mxu0 0
        %889 = vmatprep.subr.bf16.mxu0 0
        %890 = vmatpush2.bf16.msra.mxu0 0
        %891 = vmatprep.subr.bf16.mxu0 0
        %892 = vmatpush2.bf16.msra.mxu0 0
        %893 = vmatprep.subr.bf16.mxu0 0
        %894 = vmatpush2.bf16.msra.mxu0 0
        %895 = vmatprep.subr.bf16.mxu0 0
        %896 = vmatpush2.bf16.msra.mxu0 0
        %897 = vmatprep.subr.bf16.mxu0 0
        %898 = vmatpush2.bf16.msra.mxu0 0
        %899 = vmatprep.subr.bf16.mxu0 0
        %900 = vmatpush2.bf16.msra.mxu0 0
        %901 = vmatprep.subr.bf16.mxu0 0
        %902 = vmatpush2.bf16.msra.mxu0 0
        %903 = vmatprep.mubr.bf16.mxu0 0
        %904 = vmatmul.mubr.bf16.gmra.mxu0 %v866
        %v905 = vpop.f32.mrf.mxu0
        %v906 = vadd.f32 0.0, %v905
        %v907 = vpop.f32.mrf.mxu0
        %v908 = vpop.f32.mrf.mxu0
        %v909 = vpop.f32.mrf.mxu0
        %910 = vdwg.mxu0
        %v911 = vrcp.pop %v858
        %v912 = vmul.f32 %v906, %v911
        %v913 = vld [vmem:[#allocation3] sm:$0xff]
        %915 = vrot.lane.b32.xlu0 %v913, 32
        %v916 = vpop.permute.xlu0 %915
        %v918 = vmul.f32 %v912, %v916
        %v919 = vpack.c.bf16 %v918, %v918
        %v921 = vunpack.c.l.b16 %v919
        %v922 = vpack.c.b16 %v921, %v921
        %923 = vrot.lane.b32.xlu0 %v922, 96
        %v924 = vpop.permute.xlu0 %923
        %vm926 = vcmask 1044224
        %927 = vst.msk [vmem:[#allocation4] sm:$0xf] %vm926, %v924
        %v928 = vld [vmem:[#allocation4] sm:$0xf]
        %v929 = vld [vmem:[%s3] sm:$0xf]
        %v930 = vld [vmem:[%s3 + $0x4] sm:$0xf]
        %v931 = vld [vmem:[%s3 + $0x8] sm:$0xf]
        %v932 = vld [vmem:[%s3 + $0xc] sm:$0xf]
        %v933 = vld [vmem:[%s3 + $0x10] sm:$0xf]
        %v934 = vld [vmem:[%s3 + $0x14] sm:$0xf]
        %v935 = vld [vmem:[%s3 + $0x18] sm:$0xf]
        %v936 = vld [vmem:[%s3 + $0x1c] sm:$0xf]
        %v937 = vld [vmem:[%s3 + $0x20] sm:$0xf]
        %v938 = vld [vmem:[%s3 + $0x24] sm:$0xf]
        %v939 = vld [vmem:[%s3 + $0x28] sm:$0xf]
        %v940 = vld [vmem:[%s3 + $0x2c] sm:$0xf]
        %v941 = vld [vmem:[%s3 + $0x30] sm:$0xf]
        %v942 = vld [vmem:[%s3 + $0x34] sm:$0xf]
        %v943 = vld [vmem:[%s3 + $0x38] sm:$0xf]
        %v944 = vld [vmem:[%s3 + $0x3c] sm:$0xf]
        %v961 = vunpack.c.l.b16 %v929
        %v962 = vunpack.c.l.b16 %v930
        %v963 = vunpack.c.l.b16 %v931
        %v964 = vunpack.c.l.b16 %v932
        %v965 = vunpack.c.l.b16 %v933
        %v966 = vunpack.c.l.b16 %v934
        %v967 = vunpack.c.l.b16 %v935
        %v968 = vunpack.c.l.b16 %v936
        %v969 = vunpack.c.l.b16 %v937
        %v970 = vunpack.c.l.b16 %v938
        %v971 = vunpack.c.l.b16 %v939
        %v972 = vunpack.c.l.b16 %v940
        %v973 = vunpack.c.l.b16 %v941
        %v974 = vunpack.c.l.b16 %v942
        %v975 = vunpack.c.l.b16 %v943
        %v976 = vunpack.c.l.b16 %v944
        %v977 = vpack.c.b16 %v962, %v961
        %v978 = vpack.c.b16 %v964, %v963
        %v979 = vpack.c.b16 %v966, %v965
        %v980 = vpack.c.b16 %v968, %v967
        %v981 = vpack.c.b16 %v970, %v969
        %v982 = vpack.c.b16 %v972, %v971
        %v983 = vpack.c.b16 %v974, %v973
        %v984 = vpack.c.b16 %v976, %v975
        %993 = vmatprep.subr.bf16.mxu0 0
        %994 = vmatpush1.bf16.msra.mxu0 %v984
        %995 = vmatprep.subr.bf16.mxu0 0
        %996 = vmatpush1.bf16.msra.mxu0 %v983
        %997 = vmatprep.subr.bf16.mxu0 0
        %998 = vmatpush1.bf16.msra.mxu0 %v982
        %999 = vmatprep.subr.bf16.mxu0 0
        %1000 = vmatpush1.bf16.msra.mxu0 %v981
        %1001 = vmatprep.subr.bf16.mxu0 0
        %1002 = vmatpush1.bf16.msra.mxu0 %v980
        %1003 = vmatprep.subr.bf16.mxu0 0
        %1004 = vmatpush1.bf16.msra.mxu0 %v979
        %1005 = vmatprep.subr.bf16.mxu0 0
        %1006 = vmatpush1.bf16.msra.mxu0 %v978
        %1007 = vmatprep.subr.bf16.mxu0 0
        %1008 = vmatpush1.bf16.msra.mxu0 %v977
        %1009 = vmatprep.subr.bf16.mxu0 0
        %1010 = vmatpush2.bf16.msra.mxu0 0
        %1011 = vmatprep.subr.bf16.mxu0 0
        %1012 = vmatpush2.bf16.msra.mxu0 0
        %1013 = vmatprep.subr.bf16.mxu0 0
        %1014 = vmatpush2.bf16.msra.mxu0 0
        %1015 = vmatprep.subr.bf16.mxu0 0
        %1016 = vmatpush2.bf16.msra.mxu0 0
        %1017 = vmatprep.subr.bf16.mxu0 0
        %1018 = vmatpush2.bf16.msra.mxu0 0
        %1019 = vmatprep.subr.bf16.mxu0 0
        %1020 = vmatpush2.bf16.msra.mxu0 0
        %1021 = vmatprep.subr.bf16.mxu0 0
        %1022 = vmatpush2.bf16.msra.mxu0 0
        %1023 = vmatprep.subr.bf16.mxu0 0
        %1024 = vmatpush2.bf16.msra.mxu0 0
        %1025 = vmatprep.mubr.bf16.mxu0 0
        %1026 = vmatmul.mubr.bf16.gmra.mxu0 %v928
        %v1027 = vpop.f32.mrf.mxu0
        %v1028 = vadd.f32 0.0, %v1027
        %v1029 = vpop.f32.mrf.mxu0
        %v1030 = vpop.f32.mrf.mxu0
        %v1031 = vpop.f32.mrf.mxu0
        %1032 = vdwg.mxu0
        %1033 = vst.msk [vmem:[%s188] sm:$0xff] %vm236, %v1028
        %s1034 = sand.u32 %s115, 1
        %s1035 = scalar_lea.sflag [#allocation6], %s1034
        %s1036 = sand.u32 %s115, 1
        %s1037 = smul.addr %s1036, 8
        %s1038 = scalar_lea.vmem [#allocation5], %s1037
        // Predicated region
        $region37: #{tpu_custom_call.1} parent=35 // pred_check
          %p1039 = pneg %p125
        $region38: #{tpu_custom_call.1} parent=35 // pred_check_branch
          %1041 = sbr.rel (%p1039) target = $region40
        $region39: #{tpu_custom_call.1} parent=35 // pred_region
          %s1043 = ssub.s32 128, 128
          %1044 = vsyncadd %s1035, %s1043
          %s1045 = smul.addr %s18, 128
          %s1046 = scalar_lea.hbm %s4, %s1045
          %s1048 = sshll.u32 %s1038, 4
          %s1049 = int_to_ptr.vmem [resolvable:$true] %s1048
          %1051 = dma.vmem_to_hbm [thread:$0]  %s1049, 128, %s1046, %s1035
        $region40: #{tpu_custom_call.1} parent=35 // pred_fallthru
          _
      $region36: #{tpu_custom_call.1} parent=5 // pred_fallthru
        _
      %p1052 = scmp.le.s32.totalorder 2, %s13
      // Predicated region
      $region41: #{tpu_custom_call.1} parent=5 // pred_check
        %p1053 = pneg %p1052
      $region42: #{tpu_custom_call.1} parent=5 // pred_check_branch
        %1055 = sbr.rel (%p1053) target = $region44
      $region43: #{tpu_custom_call.1} parent=5 // pred_region
        %s1056 = ssub.s32 %s13, 2
        // Predicated region
        $region45: #{tpu_custom_call.1} parent=43 // pred_check
          %p1057 = pneg %p131
        $region46: #{tpu_custom_call.1} parent=43 // pred_check_branch
          %1059 = sbr.rel (%p1057) target = $region48
        $region47: #{tpu_custom_call.1} parent=43 // pred_region
          %s1060 = sand.u32 %s116, 1
          %s1061 = scalar_lea.sflag [#allocation6], %s1060
          %s1062 = sand.u32 %s116, 1
          %s1063 = smul.addr %s1062, 8
          %s1064 = scalar_lea.vmem [#allocation5], %s1063
          %1065 = dma.done %s1061, 128
        $region48: #{tpu_custom_call.1} parent=43 // pred_fallthru
          _
      $region44: #{tpu_custom_call.1} parent=5 // pred_fallthru
        _
    $region6: #{tpu_custom_call.1} parent=1 // loop_footer
      %s17 = sadd.s32 1, %s13
    $region7: #{tpu_custom_call.1} parent=1 // loop_footer_branch
      %12 = sbr.rel target = $region3
    $region8: #{tpu_custom_call.1} parent=1 // loop_exit
      _
    %1066 = vsyncpa [#allocation6], 1
    %s1067 = scalar_lea.sflag [#allocation6], 1
    %1068 = vsyncpa %s1067, 1

</llo_original>
